<compile_context>
chip_gen: v6e
topology: v6e:2x2x1
jax: 0.10.0
libtpu: 0.0.40
codegen_flags: <defaults>
</compile_context>

<pallas_src>
import jax
import jax.numpy as jnp
from jax.experimental import pallas as pl
from jax.experimental.pallas import tpu as pltpu


_SQRT_HALF = 0.7071067811865476
_FEATURE_ALIGN = 256  # 2x256^2 MXU (v6e/v7x); also a multiple of v5e's 128


def _round_up(x, m):
    return (x + m - 1) // m * m


def _cdiv(a, b):
    return (a + b - 1) // b


def _vmem_capacity_bytes():
    try:
        info = pltpu.get_tpu_info()
        cap = int(getattr(info, "vmem_capacity_bytes", 0))
        if cap > 0:
            return cap
    except Exception:
        pass
    return 64 * 1024 * 1024  # conservative fallback (v7x per-TC size)


def _gelu_exact_f32(h):
    # Exact (erf-based) GELU, matching torch.nn.GELU() default, in f32.
    return 0.5 * h * (1.0 + jax.lax.erf(h * jnp.float32(_SQRT_HALF)))


# --------------------------------------------------------------------------
# Kernels
# --------------------------------------------------------------------------

def _ffn_kernel_resident(x_ref, w1_ref, b1_ref, w2_ref, b2_ref, o_ref):
    # Weights are full-extent blocks with constant index maps: DMA'd once and
    # reused across every token tile. No k axis, no accumulator scratch.
    h = jnp.dot(x_ref[...], w1_ref[...], preferred_element_type=jnp.float32)
    h = _gelu_exact_f32(h + b1_ref[...])
    acc = jnp.dot(h.astype(w2_ref.dtype), w2_ref[...],
                  preferred_element_type=jnp.float32)
    o_ref[...] = (acc + b2_ref[...]).astype(o_ref.dtype)


def _ffn_kernel_ktiled(x_ref, w1_ref, b1_ref, w2_ref, b2_ref, o_ref, acc_ref):
    # x_ref  : (tm, dim_p)    compute dtype       (resident over k)
    # w1_ref : (dim_p, tk)    compute dtype       (k-chunk)
    # b1_ref : (1, tk)        f32                 (k-chunk)
    # w2_ref : (tk, dout_p)   compute dtype       (k-chunk)
    # b2_ref : (1, dout_p)    f32                 (resident)
    # o_ref  : (tm, dout_p)   output dtype
    # acc_ref: (tm, dout_p)   f32 accumulator, resident across the k axis
    k = pl.program_id(1)

    @pl.when(k == 0)
    def _():
        acc_ref[...] = jnp.zeros_like(acc_ref)

    h = jnp.dot(x_ref[...], w1_ref[...], preferred_element_type=jnp.float32)
    h = _gelu_exact_f32(h + b1_ref[...])
    # Exact: bias + GELU are per-inner-feature, so k-chunked GELU is valid.
    acc_ref[...] += jnp.dot(h.astype(w2_ref.dtype), w2_ref[...],
                            preferred_element_type=jnp.float32)

    @pl.when(k == pl.num_programs(1) - 1)
    def _():
        o_ref[...] = (acc_ref[...] + b2_ref[...]).astype(o_ref.dtype)


# --------------------------------------------------------------------------
# Parameter preparation (hoisted out of the per-call path)
# --------------------------------------------------------------------------

def prepare_ffn_params(w1, b1, w2, b2, *, compute_dtype=jnp.bfloat16,
                       align=_FEATURE_ALIGN):
    """Pad + cast FFN weights once (e.g. at model load).

    w1: (dim, inner), b1: (inner,), w2: (inner, dim_out), b2: (dim_out,)
    Zero padding keeps the math exact: padded W1 cols + zero b1 give h=0 and
    GELU(0)=0, which contributes nothing through the padded W2 rows; padded
    dim cols of x / rows of W1 contribute zero to the first matmul.
    """
    dim, inner = w1.shape
    inner2, dim_out = w2.shape
    assert inner == inner2, "w1/w2 inner dims mismatch"

    dim_p = _round_up(dim, align)
    inner_p = _round_up(inner, align)
    dout_p = _round_up(dim_out, align)

    cdtype = jnp.dtype(compute_dtype)
    w1_p = jnp.pad(jnp.asarray(w1, cdtype),
                   ((0, dim_p - dim), (0, inner_p - inner)))
    w2_p = jnp.pad(jnp.asarray(w2, cdtype),
                   ((0, inner_p - inner), (0, dout_p - dim_out)))
    b1_p = jnp.pad(jnp.asarray(b1, jnp.float32),
                   ((0, inner_p - inner),)).reshape(1, inner_p)
    b2_p = jnp.pad(jnp.asarray(b2, jnp.float32),
                   ((0, dout_p - dim_out),)).reshape(1, dout_p)

    return dict(w1=w1_p, b1=b1_p, w2=w2_p, b2=b2_p,
                dim=dim, inner=inner, dim_out=dim_out,
                dim_p=dim_p, inner_p=inner_p, dout_p=dout_p,
                compute_dtype=cdtype)


# --------------------------------------------------------------------------
# Tile / mode selection
# --------------------------------------------------------------------------

def _divisible_tile(total, desired, step=256):
    """Largest multiple of `step` that divides `total` and is <= desired."""
    best = step
    t = step
    limit = min(desired, total)
    while t <= limit:
        if total % t == 0:
            best = t
        t += step
    return min(best, total)


def _select_config(N, dim_p, inner_p, dout_p, cbytes, obytes, gran,
                   budget, tile_m, tile_k, prefer_two_tiles):
    """Pick ("resident", tm, None, need) or ("ktiled", tm, tk, need)."""
    N_gran = _round_up(max(N, 1), gran)

    # ---- weights-resident candidate -------------------------------------
    # Double-buffer everything conservatively; biases pad to 8 sublanes.
    fixed = (2 * dim_p * inner_p * cbytes        # W1 (full)
             + 2 * inner_p * dout_p * cbytes     # W2 (full)
             + 2 * 8 * inner_p * 4               # b1
             + 2 * 8 * dout_p * 4)               # b2
    per_tm = (2 * dim_p * cbytes                 # x tile
              + 2 * dout_p * obytes              # out tile
              + inner_p * (4 + cbytes)           # h f32 + bf16 cast
              + dout_p * 4)                      # f32 result before cast
    if fixed + gran * per_tm <= budget:
        tm_target = min(_round_up(min(tile_m, 512), gran), N_gran)
        if prefer_two_tiles and N_gran >= 2 * gran:
            tm_target = min(tm_target,
                            max(gran, _round_up(_cdiv(N, 2), gran)))
        tm_fit = max(gran, (budget - fixed) // per_tm // gran * gran)
        tm = max(gran, min(tm_target, tm_fit))
        return "resident", tm, None, fixed + tm * per_tm

    # ---- k-tiled fallback -------------------------------------------------
    def ktiled_need(tm_, tk_):
        return (2 * tm_ * dim_p * cbytes         # x tile
                + 2 * dim_p * tk_ * cbytes       # W1 k-chunk
                + 2 * 8 * tk_ * 4                # b1 k-chunk
                + 2 * tk_ * dout_p * cbytes      # W2 k-chunk
                + 2 * 8 * dout_p * 4             # b2
                + 2 * tm_ * dout_p * obytes      # out tile
                + tm_ * dout_p * 4               # f32 accumulator scratch
                + tm_ * tk_ * (4 + cbytes))      # h f32 + cast

    tk = _divisible_tile(inner_p, max(256, tile_k), 256)
    tm = min(_round_up(tile_m, gran), N_gran)
    if prefer_two_tiles and tm >= 2 * 256 and N_gran >= 2 * tm:
        tm = max(256, min(tm, _round_up(_cdiv(N, 2), gran)))

    # Shrink tk first (tm is the arithmetic-intensity driver), floor 256.
    while ktiled_need(tm, tk) > budget and tk > 256:
        tk = _divisible_tile(inner_p, max(256, tk // 2), 256)
    while ktiled_need(tm, tk) > budget and tm > gran:
        tm = max(gran, _round_up(tm // 2, gran))
    return "ktiled", tm, tk, ktiled_need(tm, tk)


# --------------------------------------------------------------------------
# Entry points
# --------------------------------------------------------------------------

def feed_forward(x, params, *, tile_m=None, tile_k=None):
    """x: (..., dim) -> (..., dim_out), using prepare_ffn_params() output."""
    dim = params["dim"]
    inner = params["inner"]
    dim_out = params["dim_out"]
    dim_p = params["dim_p"]
    inner_p = params["inner_p"]
    dout_p = params["dout_p"]
    cdtype = params["compute_dtype"]
    cbytes = cdtype.itemsize

    out_dtype = x.dtype
    obytes = jnp.dtype(out_dtype).itemsize

    orig_shape = x.shape
    N = 1
    for s in orig_shape[:-1]:
        N *= s

    # Generation-aware budgets.
    vmem_cap = _vmem_capacity_bytes()
    budget = int(vmem_cap * 0.72)
    small_vmem = vmem_cap <= 96 * 1024 * 1024   # v7x-class: 64 MiB/TC, 2 TCs
    if tile_m is None:
        tile_m = 512 if small_vmem else 1024
    if tile_k is None:
        tile_k = 512

    gran = 16 if cbytes < 4 else 8              # bf16 packs 16 sublanes/vreg

    mode, tm, tk, need = _select_config(
        N, dim_p, inner_p, dout_p, cbytes, obytes, gran,
        budget, tile_m, tile_k, prefer_two_tiles=small_vmem)

    N_p = _round_up(max(N, 1), tm)

    # Per-call work: only the cheap x reshape / cast / pad.
    x2d = jnp.pad(x.reshape(N, dim).astype(cdtype),
                  ((0, N_p - N), (0, dim_p - dim)))

    n_token_tiles = N_p // tm
    weight_reads = 1 if mode == "resident" else n_token_tiles
    cost = pl.CostEstimate(
        flops=2 * N * dim * inner + 2 * N * inner * dim_out,
        transcendentals=N * inner,
        bytes_accessed=(N_p * dim_p * cbytes
                        + weight_reads * (dim_p * inner_p
                                          + inner_p * dout_p) * cbytes
                        + (inner_p + dout_p) * 4
                        + N_p * dout_p * obytes),
    )

    vmem_limit = int(min(vmem_cap - 2 * 1024 * 1024,
                         max(need + need // 4, 32 * 1024 * 1024)))
    vmem_limit = max(vmem_limit, 16 * 1024 * 1024)

    if mode == "resident":
        grid = (n_token_tiles,)
        grid_spec = pltpu.PrefetchScalarGridSpec(
            num_scalar_prefetch=0,
            grid=grid,
            in_specs=[
                pl.BlockSpec((tm, dim_p), lambda i: (i, 0)),        # x tile
                pl.BlockSpec((dim_p, inner_p), lambda i: (0, 0)),   # W1 (resident)
                pl.BlockSpec((1, inner_p), lambda i: (0, 0)),       # b1 (resident)
                pl.BlockSpec((inner_p, dout_p), lambda i: (0, 0)),  # W2 (resident)
                pl.BlockSpec((1, dout_p), lambda i: (0, 0)),        # b2 (resident)
            ],
            out_specs=pl.BlockSpec((tm, dout_p), lambda i: (i, 0)),
            scratch_shapes=[],
        )
        kernel = _ffn_kernel_resident
        semantics = ("parallel",)
    else:
        grid = (n_token_tiles, inner_p // tk)   # reduction axis last
        grid_spec = pltpu.PrefetchScalarGridSpec(
            num_scalar_prefetch=0,
            grid=grid,
            in_specs=[
                pl.BlockSpec((tm, dim_p), lambda i, k: (i, 0)),     # x (resident over k)
                pl.BlockSpec((dim_p, tk), lambda i, k: (0, k)),     # W1 k-chunk
                pl.BlockSpec((1, tk), lambda i, k: (0, k)),         # b1 k-chunk
                pl.BlockSpec((tk, dout_p), lambda i, k: (k, 0)),    # W2 k-chunk
                pl.BlockSpec((1, dout_p), lambda i, k: (0, 0)),     # b2 (resident)
            ],
            out_specs=pl.BlockSpec((tm, dout_p), lambda i, k: (i, 0)),
            scratch_shapes=[pltpu.VMEM((tm, dout_p), jnp.float32)],
        )
        kernel = _ffn_kernel_ktiled
        semantics = ("parallel", "arbitrary")

    out2d = pl.pallas_call(
        kernel,
        out_shape=jax.ShapeDtypeStruct((N_p, dout_p), out_dtype),
        grid_spec=grid_spec,
        compiler_params=pltpu.CompilerParams(
            dimension_semantics=semantics,
            vmem_limit_bytes=vmem_limit,
        ),
        cost_estimate=cost,
    )(x2d, params["w1"], params["b1"], params["w2"], params["b2"])

    out = out2d[:N, :dim_out]
    return out.reshape(*orig_shape[:-1], dim_out)


def feed_forward_from_weights(x, w1, b1, w2, b2, *,
                              compute_dtype=jnp.bfloat16, **kwargs):
    """Convenience wrapper. Prefer prepare_ffn_params() once at model load."""
    params = prepare_ffn_params(w1, b1, w2, b2, compute_dtype=compute_dtype)
    return feed_forward(x, params, **kwargs)


def _reference(x, w1, b1, w2, b2):
    h = jnp.dot(x, w1) + b1
    h = jax.nn.gelu(h, approximate=False)
    return jnp.dot(h, w2) + b2


if __name__ == "__main__":
    # Small shapes consistent with FeedForward(dim=32, mult=4):
    #   inner_dim = 128, dim_out = 32
    B, S, dim, mult = 2, 8, 32, 4
    inner = dim * mult
    dim_out = dim

    key = jax.random.PRNGKey(0)
    kx, k1, k2, k3, k4 = jax.random.split(key, 5)

    x = jax.random.normal(kx, (B, S, dim), dtype=jnp.float32)
    # Deterministic synthetic parameters (stand-in for nn.Linear init).
    w1 = jax.random.normal(k1, (dim, inner), dtype=jnp.float32) * (1.0 / jnp.sqrt(dim))
    b1 = jax.random.normal(k2, (inner,), dtype=jnp.float32) * 0.02
    w2 = jax.random.normal(k3, (inner, dim_out), dtype=jnp.float32) * (1.0 / jnp.sqrt(inner))
    b2 = jax.random.normal(k4, (dim_out,), dtype=jnp.float32) * 0.02

    ref = _reference(x, w1, b1, w2, b2)

    # Exact-precision path (f32 MXU operands, f32 accumulation).
    params_f32 = prepare_ffn_params(w1, b1, w2, b2, compute_dtype=jnp.float32)
    out_f32 = jax.block_until_ready(feed_forward(x, params_f32))
    assert out_f32.shape == (B, S, dim_out)
    assert jnp.allclose(out_f32, ref, atol=1e-5, rtol=1e-5), "f32 mismatch vs reference"

    # Performance path (bf16 MXU operands, f32 accumulation) — looser tolerance.
    params_bf16 = prepare_ffn_params(w1, b1, w2, b2, compute_dtype=jnp.bfloat16)
    out_bf16 = jax.block_until_ready(feed_forward(x, params_bf16))
    assert out_bf16.shape == (B, S, dim_out)
    assert jnp.allclose(out_bf16, ref, atol=7.5e-2, rtol=5e-2), "bf16 mismatch vs reference"

    # Exercise the padding path: token count not a multiple of the tile.
    x_odd = jax.random.normal(kx, (1, 9, dim), dtype=jnp.float32)
    out_odd = jax.block_until_ready(feed_forward(x_odd, params_f32))
    ref_odd = _reference(x_odd, w1, b1, w2, b2)
    assert out_odd.shape == (1, 9, dim_out)
    assert jnp.allclose(out_odd, ref_odd, atol=1e-5, rtol=1e-5), "padded-N mismatch"

    # Exercise the k-tiled fallback explicitly (force a tiny budget-equivalent
    # by requesting a tile_k smaller than inner_p is not possible here since
    # the weights trivially fit; instead just check the convenience wrapper).
    out_conv = jax.block_until_ready(
        feed_forward_from_weights(x, w1, b1, w2, b2, compute_dtype=jnp.float32))
    assert jnp.allclose(out_conv, ref, atol=1e-5, rtol=1e-5), "wrapper mismatch"

    print("KERNEL_OK")
</pallas_src>

<mosaic_0001>
module attributes {stable_mosaic.version = 11 : i64} {
  func.func @_ffn_kernel_resident(%arg0: i32, %arg1: memref<8x256xf32, #tpu.memory_space<vmem>>, %arg2: memref<256x256xf32, #tpu.memory_space<vmem>>, %arg3: memref<1x256xf32, #tpu.memory_space<vmem>>, %arg4: memref<256x256xf32, #tpu.memory_space<vmem>>, %arg5: memref<1x256xf32, #tpu.memory_space<vmem>>, %arg6: memref<8x256xf32, #tpu.memory_space<vmem>>) attributes {dimension_semantics = [#tpu.dimension_semantics<parallel>], iteration_bounds = array<i64: 2>, scalar_prefetch = 0 : i64, scratch_operands = 0 : i64, tpu.core_type = #tpu.core_type<tc>, window_params = [{transform_indices = @transform_0, window_bounds = array<i64: 8, 256>}, {pipeline_mode = #tpu.pipeline_mode<synchronous>, transform_indices = @transform_1, window_bounds = array<i64: 256, 256>}, {pipeline_mode = #tpu.pipeline_mode<synchronous>, transform_indices = @transform_2, window_bounds = array<i64: 1, 256>}, {pipeline_mode = #tpu.pipeline_mode<synchronous>, transform_indices = @transform_3, window_bounds = array<i64: 256, 256>}, {pipeline_mode = #tpu.pipeline_mode<synchronous>, transform_indices = @transform_4, window_bounds = array<i64: 1, 256>}, {transform_indices = @transform_5, window_bounds = array<i64: 8, 256>}]} {
    %c0 = arith.constant 0 : index
    %c0_0 = arith.constant 0 : index
    %0 = vector.load %arg1[%c0, %c0_0] : memref<8x256xf32, #tpu.memory_space<vmem>>, vector<8x256xf32>
    %c0_1 = arith.constant 0 : index
    %c0_2 = arith.constant 0 : index
    %1 = vector.load %arg2[%c0_1, %c0_2] : memref<256x256xf32, #tpu.memory_space<vmem>>, vector<256x256xf32>
    %cst = arith.constant dense<0.000000e+00> : vector<8x256xf32>
    %2 = tpu.matmul %0, %1, %cst {dimension_numbers = #tpu.dot_dimension_numbers<[1], [0], [0], [1], [0, 0, 1, 1], [], []>} : vector<8x256xf32>, vector<256x256xf32>, vector<8x256xf32> -> vector<8x256xf32>
    %c0_3 = arith.constant 0 : index
    %c0_4 = arith.constant 0 : index
    %3 = vector.load %arg3[%c0_3, %c0_4] : memref<1x256xf32, #tpu.memory_space<vmem>>, vector<1x256xf32>
    %4 = vector.broadcast %3 : vector<1x256xf32> to vector<8x256xf32>
    %5 = arith.addf %2, %4 : vector<8x256xf32>
    %cst_5 = arith.constant 5.000000e-01 : f32
    %6 = vector.broadcast %cst_5 : f32 to vector<8x256xf32>
    %7 = arith.mulf %6, %5 : vector<8x256xf32>
    %cst_6 = arith.constant 0.707106769 : f32
    %8 = vector.broadcast %cst_6 : f32 to vector<8x256xf32>
    %9 = arith.mulf %5, %8 : vector<8x256xf32>
    %10 = math.erf %9 : vector<8x256xf32>
    %cst_7 = arith.constant 1.000000e+00 : f32
    %11 = vector.broadcast %cst_7 : f32 to vector<8x256xf32>
    %12 = arith.addf %11, %10 : vector<8x256xf32>
    %13 = arith.mulf %7, %12 : vector<8x256xf32>
    %c0_8 = arith.constant 0 : index
    %c0_9 = arith.constant 0 : index
    %14 = vector.load %arg4[%c0_8, %c0_9] : memref<256x256xf32, #tpu.memory_space<vmem>>, vector<256x256xf32>
    %cst_10 = arith.constant dense<0.000000e+00> : vector<8x256xf32>
    %15 = tpu.matmul %13, %14, %cst_10 {dimension_numbers = #tpu.dot_dimension_numbers<[1], [0], [0], [1], [0, 0, 1, 1], [], []>} : vector<8x256xf32>, vector<256x256xf32>, vector<8x256xf32> -> vector<8x256xf32>
    %c0_11 = arith.constant 0 : index
    %c0_12 = arith.constant 0 : index
    %16 = vector.load %arg5[%c0_11, %c0_12] : memref<1x256xf32, #tpu.memory_space<vmem>>, vector<1x256xf32>
    %17 = vector.broadcast %16 : vector<1x256xf32> to vector<8x256xf32>
    %18 = arith.addf %15, %17 : vector<8x256xf32>
    %c0_13 = arith.constant 0 : index
    %c0_14 = arith.constant 0 : index
    %19 = vector.load %arg6[%c0_13, %c0_14] : memref<8x256xf32, #tpu.memory_space<vmem>>, vector<8x256xf32>
    tpu.vector_store %arg6[%c0_13, %c0_14], %18 {strides = array<i32>} : memref<8x256xf32, #tpu.memory_space<vmem>>, vector<8x256xf32>,
    return
  }
  func.func @transform_0(%arg0: i32) -> (i32, i32) {
    %c0_i32 = arith.constant 0 : i32
    %c0_i32_0 = arith.constant 0 : i32
    return %arg0, %c0_i32 : i32, i32
  }
  func.func @transform_1(%arg0: i32) -> (i32, i32) {
    %c0_i32 = arith.constant 0 : i32
    %c0_i32_0 = arith.constant 0 : i32
    %c0_i32_1 = arith.constant 0 : i32
    return %c0_i32, %c0_i32_0 : i32, i32
  }
  func.func @transform_2(%arg0: i32) -> (i32, i32) {
    %c0_i32 = arith.constant 0 : i32
    %c0_i32_0 = arith.constant 0 : i32
    %c0_i32_1 = arith.constant 0 : i32
    return %c0_i32, %c0_i32_0 : i32, i32
  }
  func.func @transform_3(%arg0: i32) -> (i32, i32) {
    %c0_i32 = arith.constant 0 : i32
    %c0_i32_0 = arith.constant 0 : i32
    %c0_i32_1 = arith.constant 0 : i32
    return %c0_i32, %c0_i32_0 : i32, i32
  }
  func.func @transform_4(%arg0: i32) -> (i32, i32) {
    %c0_i32 = arith.constant 0 : i32
    %c0_i32_0 = arith.constant 0 : i32
    %c0_i32_1 = arith.constant 0 : i32
    return %c0_i32, %c0_i32_0 : i32, i32
  }
  func.func @transform_5(%arg0: i32) -> (i32, i32) {
    %c0_i32 = arith.constant 0 : i32
    %c0_i32_0 = arith.constant 0 : i32
    return %arg0, %c0_i32 : i32, i32
  }
}

</mosaic_0001>

<llo_original>
// kernel: tpu_custom_call.1
$region0: #{tpu_custom_call.1}
  #allocation0 [shape = 'u32[]', space=smem, size = 0x4, offset = 0x4, fixed_abs, tag = 'smem constant byte address 0x4 - core index']
  #allocation1 [shape = 'u32[144,128]{1,0:T(1,128)}', space=vmem, size = 0x12000, scoped, tag = 'internal scratch']
  %s0 = inlined_call_operand.hbm [shape: f32[16,256], index: 0, kind: input, shape index: {}]
  %s1 = inlined_call_operand.hbm [shape: f32[256,256], index: 1, kind: input, shape index: {}]
  %s2 = inlined_call_operand.vmem [shape: f32[1,256], index: 2, kind: input, shape index: {}]
  %s3 = inlined_call_operand.hbm [shape: f32[256,256], index: 3, kind: input, shape index: {}]
  %s4 = inlined_call_operand.vmem [shape: f32[1,256], index: 4, kind: input, shape index: {}]
  %s5 = inlined_call_operand.hbm [shape: f32[16,256], index: 5, kind: output, shape index: {}]
  %s6 = sld [smem:[#allocation0]]
  $region65: #{tpu_custom_call.1} parent=0
    _
  %s8 = ssub.s32 1, %s6
  %s9 = scalar_select 0, %s8, %s6
  $region1: #{tpu_custom_call.1} parent=0
    #allocation2 [shape = 'u8[16384]{0}', space=vmem, size = 0x4000, scoped, tag = 'input window, operand 0']
    #allocation3 [shape = 's32[2]{0}', space=sflag, size = 0x8, scoped, tag = 'scoped memory for tpu_custom_call.1']
    #allocation4 [shape = 's32[2]{0}', space=sflag, size = 0x8, scoped, tag = 'scoped memory for tpu_custom_call.1']
    #allocation5 [shape = 'u8[262144]{0}', space=vmem, size = 0x40000, scoped, tag = 'input window, operand 1, single buffered']
    #allocation6 [shape = 's32[1]{0}', space=sflag, size = 0x4, scoped, tag = 'scoped memory for tpu_custom_call.1']
    #allocation7 [shape = 'u8[262144]{0}', space=vmem, size = 0x40000, scoped, tag = 'input window, operand 3, single buffered']
    #allocation8 [shape = 'u8[16384]{0}', space=vmem, size = 0x4000, scoped, tag = 'output window, operand 0']
    %10 = vsyncpa [#allocation3], 0
    %s11 = scalar_lea.sflag [#allocation3], 1
    %12 = vsyncpa %s11, 0
    %13 = vsyncpa [#allocation6], 0
    %14 = vsyncpa [#allocation4], 0
    %s15 = scalar_lea.sflag [#allocation4], 1
    %16 = vsyncpa %s15, 0
    loop: start=0, step=1, limit=4
    $region2: #{tpu_custom_call.1} parent=1 // loop_pre_header
      _
    $region3: #{tpu_custom_call.1} parent=1 // loop_header
      %s18 = sphi 0, %s22
      %p19 = scmp.ge.s32.totalorder %s18, 4
      %s28 = sphi 0, %s30
      %s31 = sphi 0, %s28
      %s32 = sphi 0, %s31
      %s48 = sphi 0, %s32
      %s52 = sphi 0, %s52
      %s54 = sphi 0, %s52
      %s55 = sphi 0, %s54
      %s69 = sphi 0, %s55
      %s73 = sphi 0, %s73
      %s75 = sphi 0, %s73
      %s76 = sphi 0, %s75
      %s90 = sphi 0, %s76
      %s94 = sphi 0, %s94
      %s96 = sphi 0, %s94
      %s97 = sphi 0, %s96
      %s111 = sphi 0, %s97
      %s115 = sphi 0, %s115
      %s117 = sphi 0, %s115
      %s118 = sphi 0, %s117
      %s132 = sphi 0, %s118
      %s138 = sphi 0, %s140
      %s141 = sphi 0, %s138
      %s142 = sphi 0, %s141
      %s158 = sphi 0, %s142
    $region4: #{tpu_custom_call.1} parent=1 // loop_header_branch
      %21 = sbr.rel (%p19) target = $region8
    $region5: #{tpu_custom_call.1} parent=1 // loop_body
      %s23 = ssub.s32 %s18, 1
      %s24 = ssub.s32 %s18, 2
      %s25 = sadd.s32 %s18, 1
      %s26 = ssub.s32 %s18, %s25
      %p27 = scmp.eq.s32.totalorder %s26, 0
      %s29 = sadd.s32 %s28, 1
      %s30 = scalar_select %p27, %s28, %s29
      %p33 = pneg %p27
      %p34 = scmp.eq.s32.totalorder %s18, 1
      %p35 = por %p33, %p34
      %p36 = scmp.ne.s32.totalorder %s28, %s31
      %p37 = scmp.eq.s32.totalorder %s18, 0
      %p38 = por %p36, %p37
      %p39 = scmp.ne.s32.totalorder %s28, %s31
      %p40 = scmp.eq.s32.totalorder %s23, 1
      %p41 = por %p39, %p40
      %p42 = scmp.ne.s32.totalorder %s31, %s32
      %p43 = scmp.eq.s32.totalorder %s23, 0
      %p44 = por %p42, %p43
      %p45 = scmp.ne.s32.totalorder %s31, %s32
      %p46 = scmp.eq.s32.totalorder %s24, 1
      %p47 = por %p45, %p46
      %p49 = scmp.ne.s32.totalorder %s32, %s48
      %p50 = scmp.eq.s32.totalorder %s24, 0
      %p51 = por %p49, %p50
      %s53 = sadd.s32 %s52, 1
      %p56 = scmp.eq.s32.totalorder %s18, 1
      %p57 = scmp.ne.s32.totalorder %s52, %s54
      %p58 = scmp.eq.s32.totalorder %s18, 0
      %p59 = por %p57, %p58
      %p60 = scmp.ne.s32.totalorder %s52, %s54
      %p61 = scmp.eq.s32.totalorder %s23, 1
      %p62 = por %p60, %p61
      %p63 = scmp.ne.s32.totalorder %s54, %s55
      %p64 = scmp.eq.s32.totalorder %s23, 0
      %p65 = por %p63, %p64
      %p66 = scmp.ne.s32.totalorder %s54, %s55
      %p67 = scmp.eq.s32.totalorder %s24, 1
      %p68 = por %p66, %p67
      %p70 = scmp.ne.s32.totalorder %s55, %s69
      %p71 = scmp.eq.s32.totalorder %s24, 0
      %p72 = por %p70, %p71
      %s74 = sadd.s32 %s73, 1
      %p77 = scmp.eq.s32.totalorder %s18, 1
      %p78 = scmp.ne.s32.totalorder %s73, %s75
      %p79 = scmp.eq.s32.totalorder %s18, 0
      %p80 = por %p78, %p79
      %p81 = scmp.ne.s32.totalorder %s73, %s75
      %p82 = scmp.eq.s32.totalorder %s23, 1
      %p83 = por %p81, %p82
      %p84 = scmp.ne.s32.totalorder %s75, %s76
      %p85 = scmp.eq.s32.totalorder %s23, 0
      %p86 = por %p84, %p85
      %p87 = scmp.ne.s32.totalorder %s75, %s76
      %p88 = scmp.eq.s32.totalorder %s24, 1
      %p89 = por %p87, %p88
      %p91 = scmp.ne.s32.totalorder %s76, %s90
      %p92 = scmp.eq.s32.totalorder %s24, 0
      %p93 = por %p91, %p92
      %s95 = sadd.s32 %s94, 1
      %p98 = scmp.eq.s32.totalorder %s18, 1
      %p99 = scmp.ne.s32.totalorder %s94, %s96
      %p100 = scmp.eq.s32.totalorder %s18, 0
      %p101 = por %p99, %p100
      %p102 = scmp.ne.s32.totalorder %s94, %s96
      %p103 = scmp.eq.s32.totalorder %s23, 1
      %p104 = por %p102, %p103
      %p105 = scmp.ne.s32.totalorder %s96, %s97
      %p106 = scmp.eq.s32.totalorder %s23, 0
      %p107 = por %p105, %p106
      %p108 = scmp.ne.s32.totalorder %s96, %s97
      %p109 = scmp.eq.s32.totalorder %s24, 1
      %p110 = por %p108, %p109
      %p112 = scmp.ne.s32.totalorder %s97, %s111
      %p113 = scmp.eq.s32.totalorder %s24, 0
      %p114 = por %p112, %p113
      %s116 = sadd.s32 %s115, 1
      %p119 = scmp.eq.s32.totalorder %s18, 1
      %p120 = scmp.ne.s32.totalorder %s115, %s117
      %p121 = scmp.eq.s32.totalorder %s18, 0
      %p122 = por %p120, %p121
      %p123 = scmp.ne.s32.totalorder %s115, %s117
      %p124 = scmp.eq.s32.totalorder %s23, 1
      %p125 = por %p123, %p124
      %p126 = scmp.ne.s32.totalorder %s117, %s118
      %p127 = scmp.eq.s32.totalorder %s23, 0
      %p128 = por %p126, %p127
      %p129 = scmp.ne.s32.totalorder %s117, %s118
      %p130 = scmp.eq.s32.totalorder %s24, 1
      %p131 = por %p129, %p130
      %p133 = scmp.ne.s32.totalorder %s118, %s132
      %p134 = scmp.eq.s32.totalorder %s24, 0
      %p135 = por %p133, %p134
      %s136 = ssub.s32 %s18, %s25
      %p137 = scmp.eq.s32.totalorder %s136, 0
      %s139 = sadd.s32 %s138, 1
      %s140 = scalar_select %p137, %s138, %s139
      %p143 = pneg %p137
      %p144 = scmp.eq.s32.totalorder %s18, 1
      %p145 = por %p143, %p144
      %p146 = scmp.ne.s32.totalorder %s138, %s141
      %p147 = scmp.eq.s32.totalorder %s18, 0
      %p148 = por %p146, %p147
      %p149 = scmp.ne.s32.totalorder %s138, %s141
      %p150 = scmp.eq.s32.totalorder %s23, 1
      %p151 = por %p149, %p150
      %p152 = scmp.ne.s32.totalorder %s141, %s142
      %p153 = scmp.eq.s32.totalorder %s23, 0
      %p154 = por %p152, %p153
      %p155 = scmp.ne.s32.totalorder %s141, %s142
      %p156 = scmp.eq.s32.totalorder %s24, 1
      %p157 = por %p155, %p156
      %p159 = scmp.ne.s32.totalorder %s142, %s158
      %p160 = scmp.eq.s32.totalorder %s24, 0
      %p161 = por %p159, %p160
      %p162 = scmp.le.s32.totalorder 1, %s18
      %p163 = scmp.lt.s32.totalorder %s18, 3
      %p164 = pnand %p162, %p163
      %p165 = pneg %p164
      // Predicated region
      $region9: #{tpu_custom_call.1} parent=5 // pred_check
        _
      $region10: #{tpu_custom_call.1} parent=5 // pred_check_branch
        %167 = sbr.rel (%p164) target = $region12
      $region11: #{tpu_custom_call.1} parent=5 // pred_region
        %s168 = ssub.s32 %s18, 1
        // Predicated region
        $region13: #{tpu_custom_call.1} parent=11 // pred_check
          %p169 = pneg %p65
        $region14: #{tpu_custom_call.1} parent=11 // pred_check_branch
          %171 = sbr.rel (%p169) target = $region16
        $region15: #{tpu_custom_call.1} parent=11 // pred_region
          %s173 = ssub.s32 8192, 8192
          %174 = vsyncadd [#allocation6], %s173
          %s175 = sshll.u32 [#allocation5], 4
          %s176 = int_to_ptr.vmem [resolvable:$true] %s175
          %181 = dma.hbm_to_vmem [thread:$0]  %s1, 8192, %s176, [#allocation6], 256, 256, 16
        $region16: #{tpu_custom_call.1} parent=11 // pred_fallthru
          _
        // Predicated region
        $region17: #{tpu_custom_call.1} parent=11 // pred_check
          %p182 = pneg %p86
        $region18: #{tpu_custom_call.1} parent=11 // pred_check_branch
          %184 = sbr.rel (%p182) target = $region20
        $region19: #{tpu_custom_call.1} parent=11 // pred_region
          _
        $region20: #{tpu_custom_call.1} parent=11 // pred_fallthru
          _
        // Predicated region
        $region21: #{tpu_custom_call.1} parent=11 // pred_check
          %p185 = pneg %p107
        $region22: #{tpu_custom_call.1} parent=11 // pred_check_branch
          %187 = sbr.rel (%p185) target = $region24
        $region23: #{tpu_custom_call.1} parent=11 // pred_region
          %s189 = ssub.s32 8192, 8192
          %190 = vsyncadd [#allocation6], %s189
          %s191 = sshll.u32 [#allocation7], 4
          %s192 = int_to_ptr.vmem [resolvable:$true] %s191
          %197 = dma.hbm_to_vmem [thread:$0]  %s3, 8192, %s192, [#allocation6], 256, 256, 16
        $region24: #{tpu_custom_call.1} parent=11 // pred_fallthru
          _
        // Predicated region
        $region25: #{tpu_custom_call.1} parent=11 // pred_check
          %p198 = pneg %p128
        $region26: #{tpu_custom_call.1} parent=11 // pred_check_branch
          %200 = sbr.rel (%p198) target = $region28
        $region27: #{tpu_custom_call.1} parent=11 // pred_region
          _
        $region28: #{tpu_custom_call.1} parent=11 // pred_fallthru
          _
      $region12: #{tpu_custom_call.1} parent=5 // pred_fallthru
        _
      %p201 = scmp.lt.s32.totalorder %s18, 2
      // Predicated region
      $region29: #{tpu_custom_call.1} parent=5 // pred_check
        %p202 = pneg %p201
      $region30: #{tpu_custom_call.1} parent=5 // pred_check_branch
        %204 = sbr.rel (%p202) target = $region32
      $region31: #{tpu_custom_call.1} parent=5 // pred_region
        // Predicated region
        $region33: #{tpu_custom_call.1} parent=31 // pred_check
          %p205 = pneg %p38
        $region34: #{tpu_custom_call.1} parent=31 // pred_check_branch
          %207 = sbr.rel (%p205) target = $region36
        $region35: #{tpu_custom_call.1} parent=31 // pred_region
          %s208 = sand.u32 %s28, 1
          %s209 = scalar_lea.sflag [#allocation3], %s208
          %s210 = sand.u32 %s28, 1
          %s211 = smul.addr %s210, 16
          %s212 = scalar_lea.vmem [#allocation2], %s211
          %s214 = ssub.s32 256, 256
          %215 = vsyncadd %s209, %s214
          %s216 = smul.addr %s18, 2
          %s217 = smul.addr %s216, 128
          %s218 = scalar_lea.hbm %s0, %s217
          %s220 = sshll.u32 %s212, 4
          %s221 = int_to_ptr.vmem [resolvable:$true] %s220
          %223 = dma.hbm_to_vmem [thread:$0]  %s218, 256, %s221, %s209
        $region36: #{tpu_custom_call.1} parent=31 // pred_fallthru
          _
      $region32: #{tpu_custom_call.1} parent=5 // pred_fallthru
        _
      %p224 = scmp.le.s32.totalorder 1, %s18
      %p225 = scmp.lt.s32.totalorder %s18, 3
      %p226 = pnand %p224, %p225
      %p227 = pneg %p226
      // Predicated region
      $region37: #{tpu_custom_call.1} parent=5 // pred_check
        _
      $region38: #{tpu_custom_call.1} parent=5 // pred_check_branch
        %229 = sbr.rel (%p226) target = $region40
      $region39: #{tpu_custom_call.1} parent=5 // pred_region
        %s230 = ssub.s32 %s18, 1
        %s231 = sand.u32 %s31, 1
        %s232 = scalar_lea.sflag [#allocation3], %s231
        %s233 = sand.u32 %s31, 1
        %s234 = smul.addr %s233, 16
        %s235 = scalar_lea.vmem [#allocation2], %s234
        // Predicated region
        $region41: #{tpu_custom_call.1} parent=39 // pred_check
          %p236 = pneg %p44
        $region42: #{tpu_custom_call.1} parent=39 // pred_check_branch
          %238 = sbr.rel (%p236) target = $region44
        $region43: #{tpu_custom_call.1} parent=39 // pred_region
          %239 = dma.done %s232, 256
        $region44: #{tpu_custom_call.1} parent=39 // pred_fallthru
          _
        // Predicated region
        $region45: #{tpu_custom_call.1} parent=39 // pred_check
          %p240 = pneg %p65
        $region46: #{tpu_custom_call.1} parent=39 // pred_check_branch
          %242 = sbr.rel (%p240) target = $region48
        $region47: #{tpu_custom_call.1} parent=39 // pred_region
          %243 = dma.done [#allocation6], 8192
        $region48: #{tpu_custom_call.1} parent=39 // pred_fallthru
          _
        // Predicated region
        $region49: #{tpu_custom_call.1} parent=39 // pred_check
          %p244 = pneg %p107
        $region50: #{tpu_custom_call.1} parent=39 // pred_check_branch
          %246 = sbr.rel (%p244) target = $region52
        $region51: #{tpu_custom_call.1} parent=39 // pred_region
          %247 = dma.done [#allocation6], 8192
        $region52: #{tpu_custom_call.1} parent=39 // pred_fallthru
          _
        %s248 = sand.u32 %s31, 1
        %s249 = scalar_lea.sflag [#allocation3], %s248
        %s250 = sand.u32 %s31, 1
        %s251 = smul.addr %s250, 16
        %s252 = scalar_lea.vmem [#allocation2], %s251
        %p253 = pneg %p44
        %p254 = pneg %p41
        %p255 = pneg %p65
        %p256 = pneg %p62
        %p257 = pneg %p86
        %p258 = pneg %p83
        %p259 = pneg %p107
        %p260 = pneg %p104
        %p261 = pneg %p128
        %p262 = pneg %p125
        %p263 = pneg %p154
        %p264 = pneg %p151
        %s265 = sand.u32 %s141, 1
        %s266 = scalar_lea.sflag [#allocation4], %s265
        %s267 = sand.u32 %s141, 1
        %s268 = smul.addr %s267, 16
        %s269 = scalar_lea.vmem [#allocation8], %s268
        %v270 = vld [vmem:[%s235] sm:$0xff]
        %v271 = vld [vmem:[%s235 + $0x8] sm:$0xff]
        %v272 = vld [vmem:[#allocation5] sm:$0xff]
        %v273 = vld [vmem:[#allocation5 + $0x8] sm:$0xff]
        %v274 = vld [vmem:[#allocation5 + $0x10] sm:$0xff]
        %v275 = vld [vmem:[#allocation5 + $0x18] sm:$0xff]
        %v276 = vld [vmem:[#allocation5 + $0x20] sm:$0xff]
        %v277 = vld [vmem:[#allocation5 + $0x28] sm:$0xff]
        %v278 = vld [vmem:[#allocation5 + $0x30] sm:$0xff]
        %v279 = vld [vmem:[#allocation5 + $0x38] sm:$0xff]
        %v280 = vld [vmem:[#allocation5 + $0x40] sm:$0xff]
        %v281 = vld [vmem:[#allocation5 + $0x48] sm:$0xff]
        %v282 = vld [vmem:[#allocation5 + $0x50] sm:$0xff]
        %v283 = vld [vmem:[#allocation5 + $0x58] sm:$0xff]
        %v284 = vld [vmem:[#allocation5 + $0x60] sm:$0xff]
        %v285 = vld [vmem:[#allocation5 + $0x68] sm:$0xff]
        %v286 = vld [vmem:[#allocation5 + $0x70] sm:$0xff]
        %v287 = vld [vmem:[#allocation5 + $0x78] sm:$0xff]
        %v288 = vld [vmem:[#allocation5 + $0x80] sm:$0xff]
        %v289 = vld [vmem:[#allocation5 + $0x88] sm:$0xff]
        %v290 = vld [vmem:[#allocation5 + $0x90] sm:$0xff]
        %v291 = vld [vmem:[#allocation5 + $0x98] sm:$0xff]
        %v292 = vld [vmem:[#allocation5 + $0xa0] sm:$0xff]
        %v293 = vld [vmem:[#allocation5 + $0xa8] sm:$0xff]
        %v294 = vld [vmem:[#allocation5 + $0xb0] sm:$0xff]
        %v295 = vld [vmem:[#allocation5 + $0xb8] sm:$0xff]
        %v296 = vld [vmem:[#allocation5 + $0xc0] sm:$0xff]
        %v297 = vld [vmem:[#allocation5 + $0xc8] sm:$0xff]
        %v298 = vld [vmem:[#allocation5 + $0xd0] sm:$0xff]
        %v299 = vld [vmem:[#allocation5 + $0xd8] sm:$0xff]
        %v300 = vld [vmem:[#allocation5 + $0xe0] sm:$0xff]
        %v301 = vld [vmem:[#allocation5 + $0xe8] sm:$0xff]
        %v302 = vld [vmem:[#allocation5 + $0xf0] sm:$0xff]
        %v303 = vld [vmem:[#allocation5 + $0xf8] sm:$0xff]
        %v304 = vld [vmem:[#allocation5 + $0x100] sm:$0xff]
        %v305 = vld [vmem:[#allocation5 + $0x108] sm:$0xff]
        %v306 = vld [vmem:[#allocation5 + $0x110] sm:$0xff]
        %v307 = vld [vmem:[#allocation5 + $0x118] sm:$0xff]
        %v308 = vld [vmem:[#allocation5 + $0x120] sm:$0xff]
        %v309 = vld [vmem:[#allocation5 + $0x128] sm:$0xff]
        %v310 = vld [vmem:[#allocation5 + $0x130] sm:$0xff]
        %v311 = vld [vmem:[#allocation5 + $0x138] sm:$0xff]
        %v312 = vld [vmem:[#allocation5 + $0x140] sm:$0xff]
        %v313 = vld [vmem:[#allocation5 + $0x148] sm:$0xff]
        %v314 = vld [vmem:[#allocation5 + $0x150] sm:$0xff]
        %v315 = vld [vmem:[#allocation5 + $0x158] sm:$0xff]
        %v316 = vld [vmem:[#allocation5 + $0x160] sm:$0xff]
        %v317 = vld [vmem:[#allocation5 + $0x168] sm:$0xff]
        %v318 = vld [vmem:[#allocation5 + $0x170] sm:$0xff]
        %v319 = vld [vmem:[#allocation5 + $0x178] sm:$0xff]
        %v320 = vld [vmem:[#allocation5 + $0x180] sm:$0xff]
        %v321 = vld [vmem:[#allocation5 + $0x188] sm:$0xff]
        %v322 = vld [vmem:[#allocation5 + $0x190] sm:$0xff]
        %v323 = vld [vmem:[#allocation5 + $0x198] sm:$0xff]
        %v324 = vld [vmem:[#allocation5 + $0x1a0] sm:$0xff]
        %v325 = vld [vmem:[#allocation5 + $0x1a8] sm:$0xff]
        %v326 = vld [vmem:[#allocation5 + $0x1b0] sm:$0xff]
        %v327 = vld [vmem:[#allocation5 + $0x1b8] sm:$0xff]
        %v328 = vld [vmem:[#allocation5 + $0x1c0] sm:$0xff]
        %v329 = vld [vmem:[#allocation5 + $0x1c8] sm:$0xff]
        %v330 = vld [vmem:[#allocation5 + $0x1d0] sm:$0xff]
        %v331 = vld [vmem:[#allocation5 + $0x1d8] sm:$0xff]
        %v332 = vld [vmem:[#allocation5 + $0x1e0] sm:$0xff]
        %v333 = vld [vmem:[#allocation5 + $0x1e8] sm:$0xff]
        %v334 = vld [vmem:[#allocation5 + $0x1f0] sm:$0xff]
        %v335 = vld [vmem:[#allocation5 + $0x1f8] sm:$0xff]
        %v336 = vld [vmem:[%s2] sm:$0x3]
        %v338 = vlaneseq
        %v339 = vshrl.u32 %v338, 7
        %v340 = vsub.s32 0, %v339
        %v341 = vrot.slane %v336, %v340
        %v342 = vlaneseq
        %v343 = vshrl.u32 %v342, 7
        %v344 = vsub.s32 1, %v343
        %v345 = vrot.slane %v336, %v344
        %348 = vmatprep.subr.mxu0 %v303
        %349 = vmatpush1.msra.mxu0 %v302
        %350 = vmatprep.subr.mxu0 %v301
        %351 = vmatpush1.msra.mxu0 %v300
        %352 = vmatprep.subr.mxu0 %v299
        %353 = vmatpush1.msra.mxu0 %v298
        %354 = vmatprep.subr.mxu0 %v297
        %355 = vmatpush1.msra.mxu0 %v296
        %356 = vmatprep.subr.mxu0 %v295
        %357 = vmatpush1.msra.mxu0 %v294
        %358 = vmatprep.subr.mxu0 %v293
        %359 = vmatpush1.msra.mxu0 %v292
        %360 = vmatprep.subr.mxu0 %v291
        %361 = vmatpush1.msra.mxu0 %v290
        %362 = vmatprep.subr.mxu0 %v289
        %363 = vmatpush1.msra.mxu0 %v288
        %364 = vmatprep.subr.mxu0 %v287
        %365 = vmatpush1.msra.mxu0 %v286
        %366 = vmatprep.subr.mxu0 %v285
        %367 = vmatpush1.msra.mxu0 %v284
        %368 = vmatprep.subr.mxu0 %v283
        %369 = vmatpush1.msra.mxu0 %v282
        %370 = vmatprep.subr.mxu0 %v281
        %371 = vmatpush1.msra.mxu0 %v280
        %372 = vmatprep.subr.mxu0 %v279
        %373 = vmatpush1.msra.mxu0 %v278
        %374 = vmatprep.subr.mxu0 %v277
        %375 = vmatpush1.msra.mxu0 %v276
        %376 = vmatprep.subr.mxu0 %v275
        %377 = vmatpush1.msra.mxu0 %v274
        %378 = vmatprep.subr.mxu0 %v273
        %379 = vmatpush1.msra.mxu0 %v272
        %380 = vmatprep.subr.mxu0 %v335
        %381 = vmatpush2.msra.mxu0 %v334
        %382 = vmatprep.subr.mxu0 %v333
        %383 = vmatpush2.msra.mxu0 %v332
        %384 = vmatprep.subr.mxu0 %v331
        %385 = vmatpush2.msra.mxu0 %v330
        %386 = vmatprep.subr.mxu0 %v329
        %387 = vmatpush2.msra.mxu0 %v328
        %388 = vmatprep.subr.mxu0 %v327
        %389 = vmatpush2.msra.mxu0 %v326
        %390 = vmatprep.subr.mxu0 %v325
        %391 = vmatpush2.msra.mxu0 %v324
        %392 = vmatprep.subr.mxu0 %v323
        %393 = vmatpush2.msra.mxu0 %v322
        %394 = vmatprep.subr.mxu0 %v321
        %395 = vmatpush2.msra.mxu0 %v320
        %396 = vmatprep.subr.mxu0 %v319
        %397 = vmatpush2.msra.mxu0 %v318
        %398 = vmatprep.subr.mxu0 %v317
        %399 = vmatpush2.msra.mxu0 %v316
        %400 = vmatprep.subr.mxu0 %v315
        %401 = vmatpush2.msra.mxu0 %v314
        %402 = vmatprep.subr.mxu0 %v313
        %403 = vmatpush2.msra.mxu0 %v312
        %404 = vmatprep.subr.mxu0 %v311
        %405 = vmatpush2.msra.mxu0 %v310
        %406 = vmatprep.subr.mxu0 %v309
        %407 = vmatpush2.msra.mxu0 %v308
        %408 = vmatprep.subr.mxu0 %v307
        %409 = vmatpush2.msra.mxu0 %v306
        %410 = vmatprep.subr.mxu0 %v305
        %411 = vmatpush2.msra.mxu0 %v304
        %412 = vmatprep.mubr.f32.mxu0 %v271
        %413 = vmatmul.mubr.f32.gmra.mxu0 %v270
        %v414 = vpop.f32.mrf.mxu0
        %v415 = vadd.f32 %v341, %v414
        %v416 = vpop.f32.mrf.mxu0
        %v417 = vadd.f32 %v345, %v416
        %418 = vdwg.mxu0
        %v419 = vmul.f32 %v415, 0.5
        %v420 = vmul.f32 %v417, 0.5
        %v421 = vmul.f32 %v415, 0.70710677
        %v422 = vmul.f32 %v417, 0.70710677
        %v423 = verf.f32.pop %v421
        %v424 = verf.f32.pop %v422
        %v425 = vadd.f32 %v423, 1.0
        %v426 = vadd.f32 %v424, 1.0
        %v427 = vmul.f32 %v419, %v425
        %v428 = vmul.f32 %v420, %v426
        %v429 = vld [vmem:[#allocation7] sm:$0xff]
        %v430 = vld [vmem:[#allocation7 + $0x8] sm:$0xff]
        %v431 = vld [vmem:[#allocation7 + $0x10] sm:$0xff]
        %v432 = vld [vmem:[#allocation7 + $0x18] sm:$0xff]
        %v433 = vld [vmem:[#allocation7 + $0x20] sm:$0xff]
        %v434 = vld [vmem:[#allocation7 + $0x28] sm:$0xff]
        %v435 = vld [vmem:[#allocation7 + $0x30] sm:$0xff]
        %v436 = vld [vmem:[#allocation7 + $0x38] sm:$0xff]
        %v437 = vld [vmem:[#allocation7 + $0x40] sm:$0xff]
        %v438 = vld [vmem:[#allocation7 + $0x48] sm:$0xff]
        %v439 = vld [vmem:[#allocation7 + $0x50] sm:$0xff]
        %v440 = vld [vmem:[#allocation7 + $0x58] sm:$0xff]
        %v441 = vld [vmem:[#allocation7 + $0x60] sm:$0xff]
        %v442 = vld [vmem:[#allocation7 + $0x68] sm:$0xff]
        %v443 = vld [vmem:[#allocation7 + $0x70] sm:$0xff]
        %v444 = vld [vmem:[#allocation7 + $0x78] sm:$0xff]
        %v445 = vld [vmem:[#allocation7 + $0x80] sm:$0xff]
        %v446 = vld [vmem:[#allocation7 + $0x88] sm:$0xff]
        %v447 = vld [vmem:[#allocation7 + $0x90] sm:$0xff]
        %v448 = vld [vmem:[#allocation7 + $0x98] sm:$0xff]
        %v449 = vld [vmem:[#allocation7 + $0xa0] sm:$0xff]
        %v450 = vld [vmem:[#allocation7 + $0xa8] sm:$0xff]
        %v451 = vld [vmem:[#allocation7 + $0xb0] sm:$0xff]
        %v452 = vld [vmem:[#allocation7 + $0xb8] sm:$0xff]
        %v453 = vld [vmem:[#allocation7 + $0xc0] sm:$0xff]
        %v454 = vld [vmem:[#allocation7 + $0xc8] sm:$0xff]
        %v455 = vld [vmem:[#allocation7 + $0xd0] sm:$0xff]
        %v456 = vld [vmem:[#allocation7 + $0xd8] sm:$0xff]
        %v457 = vld [vmem:[#allocation7 + $0xe0] sm:$0xff]
        %v458 = vld [vmem:[#allocation7 + $0xe8] sm:$0xff]
        %v459 = vld [vmem:[#allocation7 + $0xf0] sm:$0xff]
        %v460 = vld [vmem:[#allocation7 + $0xf8] sm:$0xff]
        %v461 = vld [vmem:[#allocation7 + $0x100] sm:$0xff]
        %v462 = vld [vmem:[#allocation7 + $0x108] sm:$0xff]
        %v463 = vld [vmem:[#allocation7 + $0x110] sm:$0xff]
        %v464 = vld [vmem:[#allocation7 + $0x118] sm:$0xff]
        %v465 = vld [vmem:[#allocation7 + $0x120] sm:$0xff]
        %v466 = vld [vmem:[#allocation7 + $0x128] sm:$0xff]
        %v467 = vld [vmem:[#allocation7 + $0x130] sm:$0xff]
        %v468 = vld [vmem:[#allocation7 + $0x138] sm:$0xff]
        %v469 = vld [vmem:[#allocation7 + $0x140] sm:$0xff]
        %v470 = vld [vmem:[#allocation7 + $0x148] sm:$0xff]
        %v471 = vld [vmem:[#allocation7 + $0x150] sm:$0xff]
        %v472 = vld [vmem:[#allocation7 + $0x158] sm:$0xff]
        %v473 = vld [vmem:[#allocation7 + $0x160] sm:$0xff]
        %v474 = vld [vmem:[#allocation7 + $0x168] sm:$0xff]
        %v475 = vld [vmem:[#allocation7 + $0x170] sm:$0xff]
        %v476 = vld [vmem:[#allocation7 + $0x178] sm:$0xff]
        %v477 = vld [vmem:[#allocation7 + $0x180] sm:$0xff]
        %v478 = vld [vmem:[#allocation7 + $0x188] sm:$0xff]
        %v479 = vld [vmem:[#allocation7 + $0x190] sm:$0xff]
        %v480 = vld [vmem:[#allocation7 + $0x198] sm:$0xff]
        %v481 = vld [vmem:[#allocation7 + $0x1a0] sm:$0xff]
        %v482 = vld [vmem:[#allocation7 + $0x1a8] sm:$0xff]
        %v483 = vld [vmem:[#allocation7 + $0x1b0] sm:$0xff]
        %v484 = vld [vmem:[#allocation7 + $0x1b8] sm:$0xff]
        %v485 = vld [vmem:[#allocation7 + $0x1c0] sm:$0xff]
        %v486 = vld [vmem:[#allocation7 + $0x1c8] sm:$0xff]
        %v487 = vld [vmem:[#allocation7 + $0x1d0] sm:$0xff]
        %v488 = vld [vmem:[#allocation7 + $0x1d8] sm:$0xff]
        %v489 = vld [vmem:[#allocation7 + $0x1e0] sm:$0xff]
        %v490 = vld [vmem:[#allocation7 + $0x1e8] sm:$0xff]
        %v491 = vld [vmem:[#allocation7 + $0x1f0] sm:$0xff]
        %v492 = vld [vmem:[#allocation7 + $0x1f8] sm:$0xff]
        %v493 = vld [vmem:[%s4] sm:$0x3]
        %v495 = vlaneseq
        %v496 = vshrl.u32 %v495, 7
        %v497 = vsub.s32 0, %v496
        %v498 = vrot.slane %v493, %v497
        %v499 = vlaneseq
        %v500 = vshrl.u32 %v499, 7
        %v501 = vsub.s32 1, %v500
        %v502 = vrot.slane %v493, %v501
        %505 = vmatprep.subr.mxu0 %v460
        %506 = vmatpush1.msra.mxu0 %v459
        %507 = vmatprep.subr.mxu0 %v458
        %508 = vmatpush1.msra.mxu0 %v457
        %509 = vmatprep.subr.mxu0 %v456
        %510 = vmatpush1.msra.mxu0 %v455
        %511 = vmatprep.subr.mxu0 %v454
        %512 = vmatpush1.msra.mxu0 %v453
        %513 = vmatprep.subr.mxu0 %v452
        %514 = vmatpush1.msra.mxu0 %v451
        %515 = vmatprep.subr.mxu0 %v450
        %516 = vmatpush1.msra.mxu0 %v449
        %517 = vmatprep.subr.mxu0 %v448
        %518 = vmatpush1.msra.mxu0 %v447
        %519 = vmatprep.subr.mxu0 %v446
        %520 = vmatpush1.msra.mxu0 %v445
        %521 = vmatprep.subr.mxu0 %v444
        %522 = vmatpush1.msra.mxu0 %v443
        %523 = vmatprep.subr.mxu0 %v442
        %524 = vmatpush1.msra.mxu0 %v441
        %525 = vmatprep.subr.mxu0 %v440
        %526 = vmatpush1.msra.mxu0 %v439
        %527 = vmatprep.subr.mxu0 %v438
        %528 = vmatpush1.msra.mxu0 %v437
        %529 = vmatprep.subr.mxu0 %v436
        %530 = vmatpush1.msra.mxu0 %v435
        %531 = vmatprep.subr.mxu0 %v434
        %532 = vmatpush1.msra.mxu0 %v433
        %533 = vmatprep.subr.mxu0 %v432
        %534 = vmatpush1.msra.mxu0 %v431
        %535 = vmatprep.subr.mxu0 %v430
        %536 = vmatpush1.msra.mxu0 %v429
        %537 = vmatprep.subr.mxu0 %v492
        %538 = vmatpush2.msra.mxu0 %v491
        %539 = vmatprep.subr.mxu0 %v490
        %540 = vmatpush2.msra.mxu0 %v489
        %541 = vmatprep.subr.mxu0 %v488
        %542 = vmatpush2.msra.mxu0 %v487
        %543 = vmatprep.subr.mxu0 %v486
        %544 = vmatpush2.msra.mxu0 %v485
        %545 = vmatprep.subr.mxu0 %v484
        %546 = vmatpush2.msra.mxu0 %v483
        %547 = vmatprep.subr.mxu0 %v482
        %548 = vmatpush2.msra.mxu0 %v481
        %549 = vmatprep.subr.mxu0 %v480
        %550 = vmatpush2.msra.mxu0 %v479
        %551 = vmatprep.subr.mxu0 %v478
        %552 = vmatpush2.msra.mxu0 %v477
        %553 = vmatprep.subr.mxu0 %v476
        %554 = vmatpush2.msra.mxu0 %v475
        %555 = vmatprep.subr.mxu0 %v474
        %556 = vmatpush2.msra.mxu0 %v473
        %557 = vmatprep.subr.mxu0 %v472
        %558 = vmatpush2.msra.mxu0 %v471
        %559 = vmatprep.subr.mxu0 %v470
        %560 = vmatpush2.msra.mxu0 %v469
        %561 = vmatprep.subr.mxu0 %v468
        %562 = vmatpush2.msra.mxu0 %v467
        %563 = vmatprep.subr.mxu0 %v466
        %564 = vmatpush2.msra.mxu0 %v465
        %565 = vmatprep.subr.mxu0 %v464
        %566 = vmatpush2.msra.mxu0 %v463
        %567 = vmatprep.subr.mxu0 %v462
        %568 = vmatpush2.msra.mxu0 %v461
        %569 = vmatprep.mubr.f32.mxu0 %v428
        %570 = vmatmul.mubr.f32.gmra.mxu0 %v427
        %v571 = vpop.f32.mrf.mxu0
        %v572 = vadd.f32 %v498, %v571
        %v573 = vpop.f32.mrf.mxu0
        %v574 = vadd.f32 %v502, %v573
        %575 = vdwg.mxu0
        %576 = vst [vmem:[%s269] sm:$0xff] %v572
        %577 = vst [vmem:[%s269 + $0x8] sm:$0xff] %v574
        %s578 = sand.u32 %s141, 1
        %s579 = scalar_lea.sflag [#allocation4], %s578
        %s580 = sand.u32 %s141, 1
        %s581 = smul.addr %s580, 16
        %s582 = scalar_lea.vmem [#allocation8], %s581
        // Predicated region
        $region53: #{tpu_custom_call.1} parent=39 // pred_check
          %p583 = pneg %p151
        $region54: #{tpu_custom_call.1} parent=39 // pred_check_branch
          %585 = sbr.rel (%p583) target = $region56
        $region55: #{tpu_custom_call.1} parent=39 // pred_region
          %s587 = ssub.s32 256, 256
          %588 = vsyncadd %s579, %s587
          %s589 = smul.addr %s23, 2
          %s590 = smul.addr %s589, 128
          %s591 = scalar_lea.hbm %s5, %s590
          %s593 = sshll.u32 %s582, 4
          %s594 = int_to_ptr.vmem [resolvable:$true] %s593
          %596 = dma.vmem_to_hbm [thread:$0]  %s594, 256, %s591, %s579
        $region56: #{tpu_custom_call.1} parent=39 // pred_fallthru
          _
      $region40: #{tpu_custom_call.1} parent=5 // pred_fallthru
        _
      %p597 = scmp.le.s32.totalorder 2, %s18
      // Predicated region
      $region57: #{tpu_custom_call.1} parent=5 // pred_check
        %p598 = pneg %p597
      $region58: #{tpu_custom_call.1} parent=5 // pred_check_branch
        %600 = sbr.rel (%p598) target = $region60
      $region59: #{tpu_custom_call.1} parent=5 // pred_region
        %s601 = ssub.s32 %s18, 2
        // Predicated region
        $region61: #{tpu_custom_call.1} parent=59 // pred_check
          %p602 = pneg %p157
        $region62: #{tpu_custom_call.1} parent=59 // pred_check_branch
          %604 = sbr.rel (%p602) target = $region64
        $region63: #{tpu_custom_call.1} parent=59 // pred_region
          %s605 = sand.u32 %s142, 1
          %s606 = scalar_lea.sflag [#allocation4], %s605
          %s607 = sand.u32 %s142, 1
          %s608 = smul.addr %s607, 16
          %s609 = scalar_lea.vmem [#allocation8], %s608
          %610 = dma.done %s606, 256
        $region64: #{tpu_custom_call.1} parent=59 // pred_fallthru
          _
      $region60: #{tpu_custom_call.1} parent=5 // pred_fallthru
        _
    $region6: #{tpu_custom_call.1} parent=1 // loop_footer
      %s22 = sadd.s32 1, %s18
    $region7: #{tpu_custom_call.1} parent=1 // loop_footer_branch
      %17 = sbr.rel target = $region3
    $region8: #{tpu_custom_call.1} parent=1 // loop_exit
      _
    %611 = vsyncpa [#allocation3], 1
    %s612 = scalar_lea.sflag [#allocation3], 1
    %613 = vsyncpa %s612, 1
    %614 = vsyncpa [#allocation6], 1
    %615 = vsyncpa [#allocation4], 1
    %s616 = scalar_lea.sflag [#allocation4], 1
    %617 = vsyncpa %s616, 1

</llo_original>
